<compile_context>
chip_gen: v7x
topology: tpu7x:2x2x1
jax: 0.10.0
libtpu: 0.0.40
codegen_flags: <defaults>
</compile_context>

<pallas_src>
import functools

import jax
import jax.numpy as jnp
from jax import lax
from jax.experimental import pallas as pl
from jax.experimental.pallas import tpu as pltpu

EPS = 1e-5
_QUADS = ((0, 0), (0, 1), (1, 0), (1, 1))     # (q1, q2) = position inside the 2x2 pool window

# TODO(synk): set to jnp.bfloat16 on v6e/v7x for ~2-3x MXU throughput (BN stats and the
# affine epilogue stay f32); kept f32 here so the 1e-3 check vs the f32 reference holds.
_MXU_DTYPE = jnp.float32


def _stats_kernel(x_ref, w_ref, stats_ref):
    """Pass 1: quadrant conv via one MXU dot + running per-(quadrant,channel) sum/sumsq."""
    y = jnp.dot(w_ref[...].astype(_MXU_DTYPE), x_ref[...].astype(_MXU_DTYPE),
                preferred_element_type=jnp.float32)              # (4*Cout, L)
    stats_ref[0, :, 0:1] = jnp.sum(y, axis=1, keepdims=True)      # sum   over positions
    stats_ref[0, :, 1:2] = jnp.sum(y * y, axis=1, keepdims=True)  # sumsq over positions


def _bn_relu_pool_kernel(x_ref, w_ref, scale_ref, shift_ref, o_ref, *, cout):
    """Pass 2: quadrant conv (recompute) + folded BN affine + ReLU + fused 2x2 max-pool."""
    y = jnp.dot(w_ref[...].astype(_MXU_DTYPE), x_ref[...].astype(_MXU_DTYPE),
                preferred_element_type=jnp.float32)              # (4*Cout, L)
    z = jnp.maximum(y * scale_ref[...] + shift_ref[...], 0.0)     # BN affine + ReLU
    pooled = z[0:cout, :]                                         # quadrant 0
    for q in range(1, 4):                                         # sublane-aligned slices
        pooled = jnp.maximum(pooled, z[q * cout:(q + 1) * cout, :])
    o_ref[...] = pooled.astype(o_ref.dtype)                       # (Cout, L) lane-dense store


def _pick_lane_block(p, target=4096):
    """Largest multiple of 128 that divides p and is <= target (else the full extent)."""
    if p <= 128 or p % 128 != 0:
        return p
    l = (min(target, p) // 128) * 128
    while p % l != 0:
        l -= 128
    return l


def conv_block_forward(x, w, b, gamma, beta, *, stride, padding):
    """x: (N, Cin, H, W) f32 -> (N, Cout, Ho//2, Wo//2), matching
    MaxPool2d(2)(ReLU(BatchNorm2d(Conv2d(...)(x)))) with BN in training mode."""
    del b  # per-channel conv bias is exactly cancelled by BN batch-mean subtraction
    # TODO(synk): general conv stride; the fused quadrant decomposition assumes stride=1.
    assert stride == 1, "fused Pallas path implements stride=1"
    N, Cin, H, W = x.shape
    Cout, _, K, _ = w.shape
    Ho = H + 2 * padding - K + 1
    Wo = W + 2 * padding - K + 1
    # TODO(synk): odd conv-output sizes / MaxPool2d ceil_mode are not handled.
    assert Ho % 2 == 0 and Wo % 2 == 0, "conv output must be even for the fused 2x2 pool"
    Hp, Wp = Ho // 2, Wo // 2
    S = K + 1                       # distinct row/col offsets used by the 4 quadrants
    KKC = S * S * Cin               # stacked contraction width (= 64 for K=3, Cin=4)
    P = N * Hp * Wp                 # pooled spatial positions across the batch (lane axis)

    # ---- wrapper-side layout plumbing (pure XLA; no compute hoisted out of the kernel) ----
    x_cl = jnp.transpose(x, (0, 2, 3, 1))                                     # NHWC
    xe = jnp.pad(x_cl, ((0, 0), (padding, padding), (padding, padding), (0, 0)))
    views = [xe[:, oh:oh + 2 * Hp:2, ow:ow + 2 * Wp:2, :]                     # (N,Hp,Wp,Cin)
             for oh in range(S) for ow in range(S)]
    x_stackT = (jnp.stack(views, axis=0)                                      # (S*S,N,Hp,Wp,Cin)
                  .transpose(0, 4, 1, 2, 3)                                   # (S*S,Cin,N,Hp,Wp)
                  .reshape(KKC, P))                                           # contraction x lanes

    w_hwio = jnp.transpose(w, (2, 3, 1, 0))                                   # (K,K,Cin,Cout)
    wq_rows = []
    for (q1, q2) in _QUADS:       # zero-padded quadrant weights sharing the stacked input
        wq = jnp.zeros((S, S, Cin, Cout), w.dtype).at[q1:q1 + K, q2:q2 + K].set(w_hwio)
        wq_rows.append(wq.reshape(KKC, Cout).T)                               # (Cout, KKC)
    w_bigT = jnp.concatenate(wq_rows, axis=0)                                 # (4*Cout, KKC)

    # ---- grid / specs ----
    L = _pick_lane_block(P)                    # lane-block, multiple of 128 when possible
    G = P // L
    x_spec = pl.BlockSpec((KKC, L), lambda g: (0, g))
    w_spec = pl.BlockSpec((4 * Cout, KKC), lambda g: (0, 0))
    vec_spec = pl.BlockSpec((4 * Cout, 1), lambda g: (0, 0))
    cparams = pltpu.CompilerParams(
        dimension_semantics=("parallel",),     # position blocks are independent -> split TCs
        vmem_limit_bytes=48 * 1024 * 1024,     # <= v7x 64 MiB; plenty for v5e/v6e 128 MiB
    )
    flops = 2 * 4 * Cout * KKC * P
    bytes_x = x_stackT.size * 4 + w_bigT.size * 4

    # ---- pass 1: conv + BN batch statistics (reduced in the wrapper) ----
    stats = pl.pallas_call(
        _stats_kernel,
        out_shape=jax.ShapeDtypeStruct((G, 4 * Cout, 2), jnp.float32),
        grid=(G,),
        in_specs=[x_spec, w_spec],
        out_specs=pl.BlockSpec((1, 4 * Cout, 2), lambda g: (g, 0, 0)),
        compiler_params=cparams,
        cost_estimate=pl.CostEstimate(flops=flops, transcendentals=0,
                                      bytes_accessed=bytes_x + G * 4 * Cout * 2 * 4),
    )(x_stackT, w_bigT)

    # ---- finalize BN: fold gamma*rsqrt(var+eps) into one per-channel scale/shift ----
    m_total = float(N * Ho * Wo)
    s4 = jnp.sum(stats[:, :, 0], axis=0).reshape(4, Cout)
    ss4 = jnp.sum(stats[:, :, 1], axis=0).reshape(4, Cout)
    mean = jnp.sum(s4, axis=0) / m_total
    var = jnp.maximum(jnp.sum(ss4, axis=0) / m_total - mean * mean, 0.0)      # clamp >= 0
    scale = gamma * lax.rsqrt(var + EPS)
    shift = beta - mean * scale
    scale4 = jnp.tile(scale, 4).reshape(4 * Cout, 1)     # broadcast-ready, hoisted to wrapper
    shift4 = jnp.tile(shift, 4).reshape(4 * Cout, 1)

    # ---- pass 2: conv recompute + BN affine + ReLU + fused 2x2 max-pool ----
    out_t = pl.pallas_call(
        functools.partial(_bn_relu_pool_kernel, cout=Cout),
        out_shape=jax.ShapeDtypeStruct((Cout, P), jnp.float32),
        grid=(G,),
        in_specs=[x_spec, w_spec, vec_spec, vec_spec],
        out_specs=pl.BlockSpec((Cout, L), lambda g: (0, g)),
        compiler_params=cparams,
        cost_estimate=pl.CostEstimate(flops=flops, transcendentals=0,
                                      bytes_accessed=bytes_x + Cout * P * 4),
    )(x_stackT, w_bigT, scale4, shift4)

    # lanes are ordered (n, hp, wp) -> plain reshape/transpose back to NCHW in XLA
    return out_t.reshape(Cout, N, Hp, Wp).transpose(1, 0, 2, 3)


def reference_forward(x, w, b, gamma, beta, *, stride, padding):
    """Pure-JAX reference matching the PyTorch module (keeps the conv bias)."""
    y = lax.conv_general_dilated(
        x, w, (stride, stride), [(padding, padding), (padding, padding)],
        dimension_numbers=("NCHW", "OIHW", "NCHW"))
    y = y + b[None, :, None, None]
    mean = y.mean(axis=(0, 2, 3), keepdims=True)
    var = y.var(axis=(0, 2, 3), keepdims=True)       # biased, like BN training mode
    y = (y - mean) / jnp.sqrt(var + EPS)
    y = y * gamma[None, :, None, None] + beta[None, :, None, None]
    y = jnp.maximum(y, 0.0)
    N, C, H, W = y.shape
    return y.reshape(N, C, H // 2, 2, W // 2, 2).max(axis=(3, 5))


if __name__ == "__main__":
    # Module config: ConvBlock(in_channels=4, out_channels=8, kernel_size=3,
    #                          stride=1, padding=1)
    N, Cin, H, W = 2, 4, 16, 16
    Cout, K, stride, padding = 8, 3, 1, 1

    key = jax.random.PRNGKey(0)
    kx, kw, kb = jax.random.split(key, 3)
    x = jax.random.normal(kx, (N, Cin, H, W), dtype=jnp.float32)
    w = jax.random.normal(kw, (Cout, Cin, K, K), dtype=jnp.float32) * 0.1
    b = jax.random.normal(kb, (Cout,), dtype=jnp.float32) * 0.1
    gamma = jnp.ones((Cout,), dtype=jnp.float32)     # BN weight init
    beta = jnp.zeros((Cout,), dtype=jnp.float32)     # BN bias init

    out = conv_block_forward(x, w, b, gamma, beta, stride=stride, padding=padding)
    out = jax.block_until_ready(out)

    ref = reference_forward(x, w, b, gamma, beta, stride=stride, padding=padding)
    assert out.shape == (N, Cout, H // 2, W // 2), out.shape
    assert jnp.allclose(out, ref, atol=1e-3, rtol=1e-3), float(jnp.max(jnp.abs(out - ref)))

    print("KERNEL_OK")
</pallas_src>

<mosaic_0001>
module attributes {stable_mosaic.version = 11 : i64} {
  func.func @_stats_kernel(%arg0: i32, %arg1: memref<64x128xf32, #tpu.memory_space<vmem>>, %arg2: memref<32x64xf32, #tpu.memory_space<vmem>>, %arg3: memref<1x32x2xf32, #tpu.memory_space<vmem>>) attributes {dimension_semantics = [#tpu.dimension_semantics<parallel>], iteration_bounds = array<i64: 1>, scalar_prefetch = 0 : i64, scratch_operands = 0 : i64, tpu.core_type = #tpu.core_type<tc>, window_params = [{transform_indices = @transform_0, window_bounds = array<i64: 64, 128>}, {pipeline_mode = #tpu.pipeline_mode<synchronous>, transform_indices = @transform_1, window_bounds = array<i64: 32, 64>}, {transform_indices = @transform_2, window_bounds = array<i64: 1, 32, 2>}]} {
    %c0 = arith.constant 0 : index
    %c0_0 = arith.constant 0 : index
    %0 = vector.load %arg2[%c0, %c0_0] : memref<32x64xf32, #tpu.memory_space<vmem>>, vector<32x64xf32>
    %c0_1 = arith.constant 0 : index
    %c0_2 = arith.constant 0 : index
    %1 = vector.load %arg1[%c0_1, %c0_2] : memref<64x128xf32, #tpu.memory_space<vmem>>, vector<64x128xf32>
    %cst = arith.constant dense<0.000000e+00> : vector<32x128xf32>
    %2 = tpu.matmul %0, %1, %cst {dimension_numbers = #tpu.dot_dimension_numbers<[1], [0], [0], [1], [0, 0, 1, 1], [], []>} : vector<32x64xf32>, vector<64x128xf32>, vector<32x128xf32> -> vector<32x128xf32>
    %cst_3 = arith.constant dense<0.000000e+00> : vector<32xf32>
    %3 = vector.multi_reduction <add>, %2, %cst_3 [1] : vector<32x128xf32> to vector<32xf32>
    %4 = vector.shape_cast %3 : vector<32xf32> to vector<32x1xf32>
    %c0_4 = arith.constant 0 : index
    %c0_5 = arith.constant 0 : index
    %c0_6 = arith.constant 0 : index
    %5 = vector.load %arg3[%c0_4, %c0_5, %c0_6] : memref<1x32x2xf32, #tpu.memory_space<vmem>>, vector<1x32x1xf32>
    %6 = vector.shape_cast %5 : vector<1x32x1xf32> to vector<32x1xf32>
    %7 = vector.shape_cast %4 : vector<32x1xf32> to vector<1x32x1xf32>
    tpu.vector_store %arg3[%c0_4, %c0_5, %c0_6], %7 {strides = array<i32>} : memref<1x32x2xf32, #tpu.memory_space<vmem>>, vector<1x32x1xf32>,
    %8 = arith.mulf %2, %2 : vector<32x128xf32>
    %cst_7 = arith.constant dense<0.000000e+00> : vector<32xf32>
    %9 = vector.multi_reduction <add>, %8, %cst_7 [1] : vector<32x128xf32> to vector<32xf32>
    %10 = vector.shape_cast %9 : vector<32xf32> to vector<32x1xf32>
    %c0_8 = arith.constant 0 : index
    %c0_9 = arith.constant 0 : index
    %c1 = arith.constant 1 : index
    %11 = vector.load %arg3[%c0_8, %c0_9, %c1] : memref<1x32x2xf32, #tpu.memory_space<vmem>>, vector<1x32x1xf32>
    %12 = vector.shape_cast %11 : vector<1x32x1xf32> to vector<32x1xf32>
    %13 = vector.shape_cast %10 : vector<32x1xf32> to vector<1x32x1xf32>
    tpu.vector_store %arg3[%c0_8, %c0_9, %c1], %13 {strides = array<i32>} : memref<1x32x2xf32, #tpu.memory_space<vmem>>, vector<1x32x1xf32>,
    return
  }
  func.func @transform_0(%arg0: i32) -> (i32, i32) {
    %c0_i32 = arith.constant 0 : i32
    %c0_i32_0 = arith.constant 0 : i32
    return %c0_i32, %arg0 : i32, i32
  }
  func.func @transform_1(%arg0: i32) -> (i32, i32) {
    %c0_i32 = arith.constant 0 : i32
    %c0_i32_0 = arith.constant 0 : i32
    %c0_i32_1 = arith.constant 0 : i32
    return %c0_i32, %c0_i32_0 : i32, i32
  }
  func.func @transform_2(%arg0: i32) -> (i32, i32, i32) {
    %c0_i32 = arith.constant 0 : i32
    %c0_i32_0 = arith.constant 0 : i32
    %c0_i32_1 = arith.constant 0 : i32
    return %arg0, %c0_i32, %c0_i32_0 : i32, i32, i32
  }
}

</mosaic_0001>

<llo_original>
// kernel: tpu_custom_call.1
$region0: #{tpu_custom_call.1}
  #allocation0 [shape = 'u32[]', space=smem, size = 0x4, offset = 0x4, fixed_abs, tag = 'smem constant byte address 0x4 - core index']
  #allocation1 [shape = 'u32[144,128]{1,0:T(1,128)}', space=vmem, size = 0x12000, scoped, tag = 'internal scratch']
  %s0 = inlined_call_operand.hbm [shape: f32[64,128], index: 0, kind: input, shape index: {}]
  %s1 = inlined_call_operand.hbm [shape: f32[32,64], index: 1, kind: input, shape index: {}]
  %s2 = inlined_call_operand.vmem [shape: f32[1,32,2], index: 2, kind: output, shape index: {}]
  %s3 = sld [smem:[#allocation0]]
  $region26: #{tpu_custom_call.1} parent=0
    _
  %s5 = ssub.s32 1, %s3
  %s6 = scalar_select 0, %s5, %s3
  $region1: #{tpu_custom_call.1} parent=0
    #allocation2 [shape = 'u8[32768]{0}', space=vmem, size = 0x8000, scoped, tag = 'input window, operand 0, single buffered']
    #allocation3 [shape = 's32[1]{0}', space=sflag, size = 0x4, scoped, tag = 'scoped memory for tpu_custom_call.1']
    #allocation4 [shape = 'u8[16384]{0}', space=vmem, size = 0x4000, scoped, tag = 'input window, operand 1, single buffered']
    #allocation5 [shape = 's32[1]{0}', space=sflag, size = 0x4, scoped, tag = 'scoped memory for tpu_custom_call.1']
    %7 = vsyncpa [#allocation3], 0
    %8 = vsyncpa [#allocation5], 0
    // Predicated region
    $region2: #{tpu_custom_call.1} parent=1 // pred_check
      _
    $region3: #{tpu_custom_call.1} parent=1 // pred_check_branch
      %10 = sbr.rel (0) target = $region5
    $region4: #{tpu_custom_call.1} parent=1 // pred_region
      %s12 = ssub.s32 1024, 1024
      %13 = vsyncadd [#allocation3], %s12
      %s14 = sshll.u32 [#allocation2], 4
      %s15 = int_to_ptr.vmem [resolvable:$true] %s14
      %20 = dma.hbm_to_vmem [thread:$0]  %s0, 1024, %s15, [#allocation3], 128, 128, 8
    $region5: #{tpu_custom_call.1} parent=1 // pred_fallthru
      _
    // Predicated region
    $region6: #{tpu_custom_call.1} parent=1 // pred_check
      _
    $region7: #{tpu_custom_call.1} parent=1 // pred_check_branch
      %22 = sbr.rel (0) target = $region9
    $region8: #{tpu_custom_call.1} parent=1 // pred_region
      %s24 = ssub.s32 512, 512
      %25 = vsyncadd [#allocation5], %s24
      %s26 = sshll.u32 [#allocation4], 4
      %s27 = int_to_ptr.vmem [resolvable:$true] %s26
      %32 = dma.hbm_to_vmem [thread:$0]  %s1, 512, %s27, [#allocation5], 128, 128, 8
    $region9: #{tpu_custom_call.1} parent=1 // pred_fallthru
      _
    // Predicated region
    $region10: #{tpu_custom_call.1} parent=1 // pred_check
      _
    $region11: #{tpu_custom_call.1} parent=1 // pred_check_branch
      %34 = sbr.rel (0) target = $region13
    $region12: #{tpu_custom_call.1} parent=1 // pred_region
      %35 = dma.done [#allocation3], 1024
    $region13: #{tpu_custom_call.1} parent=1 // pred_fallthru
      _
    // Predicated region
    $region14: #{tpu_custom_call.1} parent=1 // pred_check
      _
    $region15: #{tpu_custom_call.1} parent=1 // pred_check_branch
      %37 = sbr.rel (0) target = $region17
    $region16: #{tpu_custom_call.1} parent=1 // pred_region
      %38 = dma.done [#allocation5], 512
    $region17: #{tpu_custom_call.1} parent=1 // pred_fallthru
      _
    %v39 = vld [vmem:[#allocation4] sm:$0xff]
    %v40 = vld [vmem:[#allocation4 + $0x8] sm:$0xff]
    %v41 = vld [vmem:[#allocation4 + $0x10] sm:$0xff]
    %v42 = vld [vmem:[#allocation4 + $0x18] sm:$0xff]
    %v43 = vld [vmem:[#allocation2] sm:$0xff]
    %v44 = vld [vmem:[#allocation2 + $0x8] sm:$0xff]
    %v45 = vld [vmem:[#allocation2 + $0x10] sm:$0xff]
    %v46 = vld [vmem:[#allocation2 + $0x18] sm:$0xff]
    %v47 = vld [vmem:[#allocation2 + $0x20] sm:$0xff]
    %v48 = vld [vmem:[#allocation2 + $0x28] sm:$0xff]
    %v49 = vld [vmem:[#allocation2 + $0x30] sm:$0xff]
    %v50 = vld [vmem:[#allocation2 + $0x38] sm:$0xff]
    %vm51 = vcmask 523264
    %v53 = vsel %vm51, %v39, 0
    %v56 = vsel %vm51, %v40, 0
    %v59 = vsel %vm51, %v41, 0
    %v62 = vsel %vm51, %v42, 0
    %64 = vmatprep.subr.mxu0 0.0
    %65 = vmatpush1.msra.mxu0 %v43
    %66 = vmatprep.subr.mxu0 0.0
    %67 = vmatpush1.msra.mxu0 %v44
    %68 = vmatprep.subr.mxu0 0.0
    %69 = vmatpush1.msra.mxu0 %v45
    %70 = vmatprep.subr.mxu0 0.0
    %71 = vmatpush1.msra.mxu0 %v46
    %72 = vmatprep.subr.mxu0 0.0
    %73 = vmatpush1.msra.mxu0 %v47
    %74 = vmatprep.subr.mxu0 0.0
    %75 = vmatpush1.msra.mxu0 %v48
    %76 = vmatprep.subr.mxu0 0.0
    %77 = vmatpush1.msra.mxu0 %v49
    %78 = vmatprep.subr.mxu0 0.0
    %79 = vmatpush1.msra.mxu0 %v50
    %80 = vmatprep.subr.mxu0 0.0
    %81 = vmatpush1.msra.mxu0 0.0
    %82 = vmatprep.subr.mxu0 0.0
    %83 = vmatpush1.msra.mxu0 0.0
    %84 = vmatprep.subr.mxu0 0.0
    %85 = vmatpush1.msra.mxu0 0.0
    %86 = vmatprep.subr.mxu0 0.0
    %87 = vmatpush1.msra.mxu0 0.0
    %88 = vmatprep.subr.mxu0 0.0
    %89 = vmatpush1.msra.mxu0 0.0
    %90 = vmatprep.subr.mxu0 0.0
    %91 = vmatpush1.msra.mxu0 0.0
    %92 = vmatprep.subr.mxu0 0.0
    %93 = vmatpush1.msra.mxu0 0.0
    %94 = vmatprep.subr.mxu0 0.0
    %95 = vmatpush1.msra.mxu0 0.0
    %96 = vmatprep.subr.mxu0 0.0
    %97 = vmatpush1.msra.mxu0 0.0
    %98 = vmatprep.subr.mxu0 0.0
    %99 = vmatpush1.msra.mxu0 0.0
    %100 = vmatprep.subr.mxu0 0.0
    %101 = vmatpush1.msra.mxu0 0.0
    %102 = vmatprep.subr.mxu0 0.0
    %103 = vmatpush1.msra.mxu0 0.0
    %104 = vmatprep.subr.mxu0 0.0
    %105 = vmatpush1.msra.mxu0 0.0
    %106 = vmatprep.subr.mxu0 0.0
    %107 = vmatpush1.msra.mxu0 0.0
    %108 = vmatprep.subr.mxu0 0.0
    %109 = vmatpush1.msra.mxu0 0.0
    %110 = vmatprep.subr.mxu0 0.0
    %111 = vmatpush1.msra.mxu0 0.0
    %112 = vmatprep.subr.mxu0 0.0
    %113 = vmatpush1.msra.mxu0 0.0
    %114 = vmatprep.subr.mxu0 0.0
    %115 = vmatpush1.msra.mxu0 0.0
    %116 = vmatprep.subr.mxu0 0.0
    %117 = vmatpush1.msra.mxu0 0.0
    %118 = vmatprep.subr.mxu0 0.0
    %119 = vmatpush1.msra.mxu0 0.0
    %120 = vmatprep.subr.mxu0 0.0
    %121 = vmatpush1.msra.mxu0 0.0
    %122 = vmatprep.subr.mxu0 0.0
    %123 = vmatpush1.msra.mxu0 0.0
    %124 = vmatprep.subr.mxu0 0.0
    %125 = vmatpush1.msra.mxu0 0.0
    %126 = vmatprep.subr.mxu0 0.0
    %127 = vmatpush1.msra.mxu0 0.0
    %128 = vmatprep.mubr.f32.mxu0 0.0
    %129 = vmatmul.mubr.f32.gmra.mrb[0].mxu0 %v53
    %v130 = vpop.f32.mrb[0].mxu0
    %v131 = vadd.f32 0.0, %v130
    %v132 = vpop.f32.mrb[0].mxu0
    %133 = vmatprep.mubr.f32.mxu0 0.0
    %134 = vmatmul.mubr.f32.gmra.mrb[0].mxu0 %v56
    %v135 = vpop.f32.mrb[0].mxu0
    %v136 = vadd.f32 0.0, %v135
    %v137 = vpop.f32.mrb[0].mxu0
    %138 = vmatprep.mubr.f32.mxu0 0.0
    %139 = vmatmul.mubr.f32.gmra.mrb[0].mxu0 %v59
    %v140 = vpop.f32.mrb[0].mxu0
    %v141 = vadd.f32 0.0, %v140
    %v142 = vpop.f32.mrb[0].mxu0
    %143 = vmatprep.mubr.f32.mxu0 0.0
    %144 = vmatmul.mubr.f32.gmra.mrb[0].mxu0 %v62
    %v145 = vpop.f32.mrb[0].mxu0
    %v146 = vadd.f32 0.0, %v145
    %v147 = vpop.f32.mrb[0].mxu0
    %148 = vdwg.mxu0
    %149 = vadd.xlane.f32.xlu0 %v131
    %v150 = vpop.xlane.xlu0 %149
    %151 = vadd.xlane.f32.xlu0 %v136
    %v152 = vpop.xlane.xlu0 %151
    %153 = vadd.xlane.f32.xlu0 %v141
    %v154 = vpop.xlane.xlu0 %153
    %155 = vadd.xlane.f32.xlu0 %v146
    %v156 = vpop.xlane.xlu0 %155
    %vm157 = vcmask 7168
    %158 = vst.msk [vmem:[%s2] sm:$0xff] %vm157, %v150
    %159 = vst.msk [vmem:[%s2 + $0x8] sm:$0xff] %vm157, %v152
    %160 = vst.msk [vmem:[%s2 + $0x10] sm:$0xff] %vm157, %v154
    %161 = vst.msk [vmem:[%s2 + $0x18] sm:$0xff] %vm157, %v156
    %v162 = vmul.f32 %v131, %v131
    %v163 = vmul.f32 %v136, %v136
    %v164 = vmul.f32 %v141, %v141
    %v165 = vmul.f32 %v146, %v146
    %166 = vadd.xlane.f32.xlu0 %v162
    %v167 = vpop.xlane.xlu0 %166
    %168 = vadd.xlane.f32.xlu0 %v163
    %v169 = vpop.xlane.xlu0 %168
    %170 = vadd.xlane.f32.xlu0 %v164
    %v171 = vpop.xlane.xlu0 %170
    %172 = vadd.xlane.f32.xlu0 %v165
    %v173 = vpop.xlane.xlu0 %172
    %vm174 = vcmask 15368
    %175 = vst.msk [vmem:[%s2] sm:$0xff] %vm174, %v167
    %176 = vst.msk [vmem:[%s2 + $0x8] sm:$0xff] %vm174, %v169
    %177 = vst.msk [vmem:[%s2 + $0x10] sm:$0xff] %vm174, %v171
    %178 = vst.msk [vmem:[%s2 + $0x18] sm:$0xff] %vm174, %v173
    // Predicated region
    $region18: #{tpu_custom_call.1} parent=1 // pred_check
      _
    $region19: #{tpu_custom_call.1} parent=1 // pred_check_branch
      %180 = sbr.rel (0) target = $region21
    $region20: #{tpu_custom_call.1} parent=1 // pred_region
      _
    $region21: #{tpu_custom_call.1} parent=1 // pred_fallthru
      _
    // Predicated region
    $region22: #{tpu_custom_call.1} parent=1 // pred_check
      _
    $region23: #{tpu_custom_call.1} parent=1 // pred_check_branch
      %182 = sbr.rel (0) target = $region25
    $region24: #{tpu_custom_call.1} parent=1 // pred_region
      _
    $region25: #{tpu_custom_call.1} parent=1 // pred_fallthru
      _
    %183 = vsyncpa [#allocation3], 1
    %184 = vsyncpa [#allocation5], 1

</llo_original>
